<compile_context>
chip_gen: v5e
topology: v5e:2x2
jax: 0.10.0
libtpu: 0.0.40
codegen_flags: <defaults>
</compile_context>

<pallas_src>
import jax
import jax.numpy as jnp
from jax.experimental import pallas as pl
from jax.experimental.pallas import tpu as pltpu

IGNORE_INDEX = -100  # F.nll_loss default


def nll_loss(pred: jax.Array, target: jax.Array, *,
             tile_n: int = 512, tile_c: int = 2048,
             ignore_index: int = IGNORE_INDEX) -> jax.Array:
    """Pallas equivalent of torch.nn.functional.nll_loss(pred, target)."""
    n, c = pred.shape

    # (8, 128)-aligned tiles (or the full dim when it is smaller than a tile).
    tn = n if n <= tile_n else max(8, (tile_n // 8) * 8)
    tc = c if c <= tile_c else max(128, (tile_c // 128) * 128)
    n_tiles = pl.cdiv(n, tn)
    c_tiles = pl.cdiv(c, tc)

    tgt2d = target.astype(jnp.int32).reshape(n, 1)

    def kernel(pred_ref, tgt_ref, out_ref, acc_ref):
        ni = pl.program_id(0)
        ci = pl.program_id(1)
        row0 = ni * tn
        col0 = ci * tc

        @pl.when((ni == 0) & (ci == 0))
        def _init():
            acc_ref[0] = jnp.float32(0.0)   # sum of gathered log-probs
            acc_ref[1] = jnp.float32(0.0)   # count of non-ignored rows

        tgt = tgt_ref[...]                  # (tn, 1) int32

        # Count valid rows once per row tile (first class tile only).
        @pl.when(ci == 0)
        def _count():
            row_ids = row0 + jax.lax.broadcasted_iota(jnp.int32, (tn, 1), 0)
            valid = (row_ids < n) & (tgt != ignore_index)
            acc_ref[1] += jnp.sum(valid.astype(jnp.float32))

        # Fused gather: select pred where (global class id == target), masking
        # padded rows of a ragged last row tile.  ignore_index and
        # out-of-this-tile targets simply never match.
        pred_f32 = pred_ref[...].astype(jnp.float32)            # (tn, tc)
        rows = row0 + jax.lax.broadcasted_iota(jnp.int32, (tn, tc), 0)
        cols = col0 + jax.lax.broadcasted_iota(jnp.int32, (tn, tc), 1)
        hit = (cols == tgt) & (rows < n)
        acc_ref[0] += jnp.sum(jnp.where(hit, pred_f32, jnp.float32(0.0)))

        @pl.when((ni == pl.num_programs(0) - 1)
                 & (ci == pl.num_programs(1) - 1))
        def _finalize():
            out_ref[0, 0] = -(acc_ref[0] / acc_ref[1])

    out = pl.pallas_call(
        kernel,
        out_shape=jax.ShapeDtypeStruct((1, 1), jnp.float32),
        grid_spec=pltpu.PrefetchScalarGridSpec(
            num_scalar_prefetch=0,
            grid=(n_tiles, c_tiles),
            in_specs=[
                pl.BlockSpec((tn, tc), lambda ni, ci: (ni, ci)),  # pred tile
                pl.BlockSpec((tn, 1), lambda ni, ci: (ni, 0)),    # target col
            ],
            out_specs=pl.BlockSpec(memory_space=pltpu.SMEM),      # scalar loss
            scratch_shapes=[pltpu.SMEM((2,), jnp.float32)],       # [sum, count]
        ),
        compiler_params=pltpu.CompilerParams(
            # Both axes feed one shared accumulator -> reduction axes.
            dimension_semantics=("arbitrary", "arbitrary"),
        ),
    )(pred, tgt2d)

    return out[0, 0]


if __name__ == "__main__":
    key = jax.random.PRNGKey(0)
    k1, k2, k3, k4 = jax.random.split(key, 4)

    # --- small shape consistent with the module: batch=8, classes=32, f32 ---
    N, C = 8, 32
    logits = jax.random.normal(k1, (N, C), dtype=jnp.float32)
    pred = jax.nn.log_softmax(logits, axis=-1)          # log-probabilities
    target = jax.random.randint(k2, (N,), 0, C, dtype=jnp.int32)

    loss = nll_loss(pred, target)
    jax.block_until_ready(loss)
    ref = -jnp.mean(pred[jnp.arange(N), target])
    assert jnp.allclose(loss, ref, atol=1e-6, rtol=1e-6), (loss, ref)

    # --- bf16 input, ragged multi-tile grid, ignore_index exercised ---
    N2, C2 = 40, 300
    logits2 = jax.random.normal(k3, (N2, C2), dtype=jnp.float32)
    pred2 = jax.nn.log_softmax(logits2, axis=-1).astype(jnp.bfloat16)
    target2 = jax.random.randint(k4, (N2,), 0, C2, dtype=jnp.int32)
    target2 = target2.at[3].set(IGNORE_INDEX)           # torch-style ignored row

    loss2 = nll_loss(pred2, target2, tile_n=16, tile_c=128)
    jax.block_until_ready(loss2)

    p2 = pred2.astype(jnp.float32)
    valid = target2 != IGNORE_INDEX
    picked = p2[jnp.arange(N2), jnp.where(valid, target2, 0)]
    ref2 = -jnp.sum(jnp.where(valid, picked, 0.0)) / jnp.sum(valid)
    assert jnp.allclose(loss2, ref2, atol=1e-5, rtol=1e-5), (loss2, ref2)

    print("KERNEL_OK")
</pallas_src>

<mosaic_0001>
module attributes {stable_mosaic.version = 11 : i64} {
  func.func @kernel(%arg0: i32, %arg1: i32, %arg2: memref<8x32xf32, #tpu.memory_space<vmem>>, %arg3: memref<8x1xi32, #tpu.memory_space<vmem>>, %arg4: memref<1x1xf32, #tpu.memory_space<smem>>, %arg5: memref<2xf32, #tpu.memory_space<smem>>) attributes {dimension_semantics = [#tpu.dimension_semantics<arbitrary>, #tpu.dimension_semantics<arbitrary>], iteration_bounds = array<i64: 1, 1>, scalar_prefetch = 0 : i64, scratch_operands = 1 : i64, tpu.core_type = #tpu.core_type<tc>, window_params = [{transform_indices = @transform_0, window_bounds = array<i64: 8, 32>}, {transform_indices = @transform_1, window_bounds = array<i64: 8, 1>}, {transform_indices = @transform_2, window_bounds = array<i64: 1, 1>}]} {
    %c8_i32 = arith.constant 8 : i32
    %0 = arith.muli %arg0, %c8_i32 : i32
    %c32_i32 = arith.constant 32 : i32
    %1 = arith.muli %arg1, %c32_i32 : i32
    %c0_i32 = arith.constant 0 : i32
    %2 = arith.cmpi eq, %arg0, %c0_i32 : i32
    %c0_i32_0 = arith.constant 0 : i32
    %3 = arith.cmpi eq, %arg1, %c0_i32_0 : i32
    %4 = arith.andi %2, %3 : i1
    %5 = arith.extui %4 : i1 to i32
    %c0_i32_1 = arith.constant 0 : i32
    %6 = arith.cmpi ne, %5, %c0_i32_1 : i32
    scf.if %6 {
      %cst_14 = arith.constant 0.000000e+00 : f32
      %c0_15 = arith.constant 0 : index
      %37 = memref.load %arg5[%c0_15] : memref<2xf32, #tpu.memory_space<smem>>
      memref.store %cst_14, %arg5[%c0_15] : memref<2xf32, #tpu.memory_space<smem>>
      %cst_16 = arith.constant 0.000000e+00 : f32
      %c1 = arith.constant 1 : index
      %38 = memref.load %arg5[%c1] : memref<2xf32, #tpu.memory_space<smem>>
      memref.store %cst_16, %arg5[%c1] : memref<2xf32, #tpu.memory_space<smem>>
    } else {
    }
    %c0 = arith.constant 0 : index
    %c0_2 = arith.constant 0 : index
    %7 = vector.load %arg3[%c0, %c0_2] : memref<8x1xi32, #tpu.memory_space<vmem>>, vector<8x1xi32>
    %c0_i32_3 = arith.constant 0 : i32
    %8 = arith.cmpi eq, %arg1, %c0_i32_3 : i32
    %9 = arith.extui %8 : i1 to i32
    %c0_i32_4 = arith.constant 0 : i32
    %10 = arith.cmpi ne, %9, %c0_i32_4 : i32
    scf.if %10 {
      %37 = tpu.iota {dimensions = array<i32: 0>} : vector<8x1xi32>
      %38 = vector.broadcast %0 : i32 to vector<8x1xi32>
      %39 = arith.addi %38, %37 : vector<8x1xi32>
      %c8_i32_14 = arith.constant 8 : i32
      %40 = vector.broadcast %c8_i32_14 : i32 to vector<8x1xi32>
      %41 = arith.cmpi slt, %39, %40 : vector<8x1xi32>
      %c-100_i32 = arith.constant -100 : i32
      %42 = vector.broadcast %c-100_i32 : i32 to vector<8x1xi32>
      %43 = arith.cmpi ne, %7, %42 : vector<8x1xi32>
      %44 = arith.andi %41, %43 : vector<8x1xi1>
      %c1 = arith.constant 1 : index
      %45 = memref.load %arg5[%c1] : memref<2xf32, #tpu.memory_space<smem>>
      %46 = arith.extui %44 : vector<8x1xi1> to vector<8x1xi32>
      %47 = arith.sitofp %46 : vector<8x1xi32> to vector<8x1xf32>
      %48 = vector.shape_cast %47 : vector<8x1xf32> to vector<1x8x1xf32>
      %cst_15 = arith.constant dense<0.000000e+00> : vector<1xf32>
      %49 = vector.multi_reduction <add>, %48, %cst_15 [1, 2] : vector<1x8x1xf32> to vector<1xf32>
      %50 = vector.shape_cast %49 : vector<1xf32> to vector<1x1x1xf32>
      %51 = vector.extract %50[0, 0, 0] : f32 from vector<1x1x1xf32>
      %52 = arith.addf %45, %51 : f32
      %c1_16 = arith.constant 1 : index
      %53 = memref.load %arg5[%c1_16] : memref<2xf32, #tpu.memory_space<smem>>
      memref.store %52, %arg5[%c1_16] : memref<2xf32, #tpu.memory_space<smem>>
    } else {
    }
    %c0_5 = arith.constant 0 : index
    %c0_6 = arith.constant 0 : index
    %11 = vector.load %arg2[%c0_5, %c0_6] : memref<8x32xf32, #tpu.memory_space<vmem>>, vector<8x32xf32>
    %12 = tpu.iota {dimensions = array<i32: 0>} : vector<8x32xi32>
    %13 = vector.broadcast %0 : i32 to vector<8x32xi32>
    %14 = arith.addi %13, %12 : vector<8x32xi32>
    %15 = tpu.iota {dimensions = array<i32: 1>} : vector<8x32xi32>
    %16 = vector.broadcast %1 : i32 to vector<8x32xi32>
    %17 = arith.addi %16, %15 : vector<8x32xi32>
    %18 = vector.broadcast %7 : vector<8x1xi32> to vector<8x32xi32>
    %19 = arith.cmpi eq, %17, %18 : vector<8x32xi32>
    %c8_i32_7 = arith.constant 8 : i32
    %20 = vector.broadcast %c8_i32_7 : i32 to vector<8x32xi32>
    %21 = arith.cmpi slt, %14, %20 : vector<8x32xi32>
    %22 = arith.andi %19, %21 : vector<8x32xi1>
    %c0_8 = arith.constant 0 : index
    %23 = memref.load %arg5[%c0_8] : memref<2xf32, #tpu.memory_space<smem>>
    %cst = arith.constant 0.000000e+00 : f32
    %24 = vector.broadcast %cst : f32 to vector<8x32xf32>
    %25 = arith.select %22, %11, %24 : vector<8x32xi1>, vector<8x32xf32>
    %26 = vector.shape_cast %25 : vector<8x32xf32> to vector<1x8x32xf32>
    %cst_9 = arith.constant dense<0.000000e+00> : vector<1xf32>
    %27 = vector.multi_reduction <add>, %26, %cst_9 [1, 2] : vector<1x8x32xf32> to vector<1xf32>
    %28 = vector.shape_cast %27 : vector<1xf32> to vector<1x1x1xf32>
    %29 = vector.extract %28[0, 0, 0] : f32 from vector<1x1x1xf32>
    %30 = arith.addf %23, %29 : f32
    %c0_10 = arith.constant 0 : index
    %31 = memref.load %arg5[%c0_10] : memref<2xf32, #tpu.memory_space<smem>>
    memref.store %30, %arg5[%c0_10] : memref<2xf32, #tpu.memory_space<smem>>
    %c0_i32_11 = arith.constant 0 : i32
    %32 = arith.cmpi eq, %arg0, %c0_i32_11 : i32
    %c0_i32_12 = arith.constant 0 : i32
    %33 = arith.cmpi eq, %arg1, %c0_i32_12 : i32
    %34 = arith.andi %32, %33 : i1
    %35 = arith.extui %34 : i1 to i32
    %c0_i32_13 = arith.constant 0 : i32
    %36 = arith.cmpi ne, %35, %c0_i32_13 : i32
    scf.if %36 {
      %c0_14 = arith.constant 0 : index
      %37 = memref.load %arg5[%c0_14] : memref<2xf32, #tpu.memory_space<smem>>
      %c1 = arith.constant 1 : index
      %38 = memref.load %arg5[%c1] : memref<2xf32, #tpu.memory_space<smem>>
      %39 = arith.divf %37, %38 : f32
      %cst_15 = arith.constant 0.000000e+00 : f32
      %40 = arith.subf %cst_15, %39 : f32
      %c0_16 = arith.constant 0 : index
      %c0_17 = arith.constant 0 : index
      %41 = memref.load %arg4[%c0_16, %c0_17] : memref<1x1xf32, #tpu.memory_space<smem>>
      memref.store %40, %arg4[%c0_16, %c0_17] : memref<1x1xf32, #tpu.memory_space<smem>>
    } else {
    }
    return
  }
  func.func @transform_0(%arg0: i32, %arg1: i32) -> (i32, i32) {
    %c0_i32 = arith.constant 0 : i32
    return %arg0, %arg1 : i32, i32
  }
  func.func @transform_1(%arg0: i32, %arg1: i32) -> (i32, i32) {
    %c0_i32 = arith.constant 0 : i32
    %c0_i32_0 = arith.constant 0 : i32
    return %arg0, %c0_i32 : i32, i32
  }
  func.func @transform_2(%arg0: i32, %arg1: i32) -> (i32, i32) {
    %c0_i32 = arith.constant 0 : i32
    %c0_i32_0 = arith.constant 0 : i32
    %c0_i32_1 = arith.constant 0 : i32
    return %c0_i32, %c0_i32_0 : i32, i32
  }
}

</mosaic_0001>

<llo_original>
// kernel: tpu_custom_call.1
$region0: #{tpu_custom_call.1}
  #allocation0 [shape = 'u32[]', space=smem, size = 0x4, offset = 0x4, fixed_abs, tag = 'smem constant byte address 0x4 - core index']
  #allocation1 [shape = 'u32[72,128]{1,0:T(1,128)}', space=vmem, size = 0x9000, scoped, tag = 'internal scratch']
  #allocation2 [shape = 'f32[2]{0:T(128)}', space=smem, size = 0x200, scoped, tag = 'scratch operand']
  %s0 = inlined_call_operand.vmem [shape: f32[8,32], index: 0, kind: input, shape index: {}]
  %s1 = inlined_call_operand.vmem [shape: s32[8,1], index: 1, kind: input, shape index: {}]
  %s2 = inlined_call_operand.hbm [shape: f32[1,1], index: 2, kind: output, shape index: {}]
  %s3 = sld [smem:[#allocation0]]
  $region30: #{tpu_custom_call.1} parent=0
    _
  %s5 = ssub.s32 1, %s3
  %s6 = scalar_select 0, %s5, %s3
  $region1: #{tpu_custom_call.1} parent=0
    #allocation3 [shape = 'u8[512]{0}', space=smem, size = 0x200, scoped, tag = 'output window, operand 0, single buffered']
    #allocation4 [shape = 's32[1]{0}', space=sflag, size = 0x4, scoped, tag = 'scoped memory for tpu_custom_call.1']
    %7 = vsyncpa [#allocation4], 0
    // Predicated region
    $region2: #{tpu_custom_call.1} parent=1 // pred_check
      _
    $region3: #{tpu_custom_call.1} parent=1 // pred_check_branch
      %9 = sbr.rel (0) target = $region5
    $region4: #{tpu_custom_call.1} parent=1 // pred_region
      _
    $region5: #{tpu_custom_call.1} parent=1 // pred_fallthru
      _
    // Predicated region
    $region6: #{tpu_custom_call.1} parent=1 // pred_check
      _
    $region7: #{tpu_custom_call.1} parent=1 // pred_check_branch
      %11 = sbr.rel (0) target = $region9
    $region8: #{tpu_custom_call.1} parent=1 // pred_region
      _
    $region9: #{tpu_custom_call.1} parent=1 // pred_fallthru
      _
    %s12 = smul.u32 0, 8
    %s13 = smul.u32 0, 32
    %p14 = scmp.eq.s32.totalorder 0, 0
    %p15 = scmp.eq.s32.totalorder 0, 0
    %p16 = pnand %p14, %p15
    %p17 = pneg %p16
    // Predicated region
    $region10: #{tpu_custom_call.1} parent=1 // pred_check
      _
    $region11: #{tpu_custom_call.1} parent=1 // pred_check_branch
      %19 = sbr.rel (%p16) target = $region13
    $region12: #{tpu_custom_call.1} parent=1 // pred_region
      %s20 = scalar_lea.smem [#allocation2], 0
      %21 = sst [smem:[%s20]] 0.0
      %s22 = scalar_lea.smem [#allocation2], 1
      %23 = sst [smem:[%s22]] 0.0
    $region13: #{tpu_custom_call.1} parent=1 // pred_fallthru
      _
    %v24 = vld [vmem:[%s1] sm:$0xff]
    // Predicated region
    $region14: #{tpu_custom_call.1} parent=1 // pred_check
      %p25 = pneg %p15
    $region15: #{tpu_custom_call.1} parent=1 // pred_check_branch
      %27 = sbr.rel (%p25) target = $region17
    $region16: #{tpu_custom_call.1} parent=1 // pred_region
      %v28 = vlaneseq
      %v29 = vshrl.u32 %v28, 7
      %v30 = vstv %s12
      %v31 = vadd.s32 %v30, %v29
      %vm32 = vcmp.lt.s32.totalorder %v31, 8
      %vm33 = vcmp.ne.s32.totalorder %v24, 4294967196
      %vm34 = vmand %vm32, %vm33
      %s35 = sld [smem:[#allocation2 + $0x1]]
      %v36 = vsel %vm34, 1, 0
      %v37 = vcvt.s32.f32 %v36
      %vm38 = vcmask 7168
      %v39 = vsel %vm38, %v37, 0.0
      %40 = vadd.xlane.f32.xlu0 %v39
      %v41 = vpop.xlane.xlu0 %40
      %v42 = vrot.slane %v41, 4
      %v43 = vadd.f32 %v41, %v42
      %v44 = vrot.slane %v43, 2
      %v45 = vadd.f32 %v43, %v44
      %v46 = vrot.slane %v45, 1
      %v47 = vadd.f32 %v45, %v46
      %s48 = vtos %v47
      %s49 = sadd.f32 %s35, %s48
      %s50 = scalar_lea.smem [#allocation2], 1
      %51 = sst [smem:[%s50]] %s49
    $region17: #{tpu_custom_call.1} parent=1 // pred_fallthru
      _
    %v52 = vld [vmem:[%s0] sm:$0xff]
    %v53 = vlaneseq
    %v54 = vshrl.u32 %v53, 7
    %v55 = vstv %s12
    %v56 = vadd.s32 %v55, %v54
    %v57 = vlaneseq
    %v58 = vand.u32 %v57, 127
    %v59 = vstv %s13
    %v60 = vadd.s32 %v59, %v58
    %61 = vset.pattern.permute.xlu0 0
    %62 = vperm.xlu0 %61, %v24
    %v63 = vpop.permute.xlu0 %62
    %vm64 = vcmp.eq.s32.totalorder %v60, %v63
    %vm65 = vcmp.lt.s32.totalorder %v56, 8
    %vm66 = vmand %vm64, %vm65
    %s67 = sld [smem:[#allocation2]]
    %v68 = vsel %vm66, %v52, 0.0
    %vm69 = vcmask 261120
    %v70 = vsel %vm69, %v68, 0.0
    %71 = vadd.xlane.f32.xlu0 %v70
    %v72 = vpop.xlane.xlu0 %71
    %v73 = vrot.slane %v72, 4
    %v74 = vadd.f32 %v72, %v73
    %v75 = vrot.slane %v74, 2
    %v76 = vadd.f32 %v74, %v75
    %v77 = vrot.slane %v76, 1
    %v78 = vadd.f32 %v76, %v77
    %s79 = vtos %v78
    %s80 = sadd.f32 %s67, %s79
    %s81 = scalar_lea.smem [#allocation2], 0
    %82 = sst [smem:[%s81]] %s80
    // Predicated region
    $region18: #{tpu_custom_call.1} parent=1 // pred_check
      _
    $region19: #{tpu_custom_call.1} parent=1 // pred_check_branch
      %84 = sbr.rel (%p16) target = $region21
    $region20: #{tpu_custom_call.1} parent=1 // pred_region
      %s85 = sld [smem:[#allocation2]]
      %s86 = sld [smem:[#allocation2 + $0x1]]
      %v87 = vstv %s86
      %v88 = vrcp.pop %v87
      %v89 = vmul.f32 %v87, %v88
      %v90 = vsub.f32 1.0, %v89
      %v91 = vmul.f32 %v88, %v90
      %v92 = vadd.f32 %v88, %v91
      %vm93 = vweird.f32 %v87
      %vm94 = vweird.f32 %v88
      %vm95 = vmor %vm93, %vm94
      %v96 = vsel %vm95, %v88, %v92
      %v97 = vand.u32 2147483647, %v87
      %vm98 = vcmp.eq.f32.partialorder %v97, 8.507059e+37
      %v99 = vand.u32 %v87, 2147483648
      %v100 = vor.u32 1.1754944e-38, %v99
      %v101 = vsel %vm98, %v100, %v96
      %s102 = vtos %v101
      %s103 = smul.f32 %s85, %s102
      %s104 = ssub.f32 0.0, %s103
      %s105 = scalar_lea.smem [#allocation3], 0
      %106 = sst [smem:[%s105]] %s104
    $region21: #{tpu_custom_call.1} parent=1 // pred_fallthru
      _
    // Predicated region
    $region22: #{tpu_custom_call.1} parent=1 // pred_check
      _
    $region23: #{tpu_custom_call.1} parent=1 // pred_check_branch
      %108 = sbr.rel (0) target = $region25
    $region24: #{tpu_custom_call.1} parent=1 // pred_region
      %110 = vsyncadd [#allocation4], 0
      %s112 = sshll.u32 %s2, 4
      %s113 = int_to_ptr.hbm [resolvable:$true] %s112
      %115 = dma.smem_to_hbm [#allocation3], 16, %s113, [#allocation4]
    $region25: #{tpu_custom_call.1} parent=1 // pred_fallthru
      _
    // Predicated region
    $region26: #{tpu_custom_call.1} parent=1 // pred_check
      _
    $region27: #{tpu_custom_call.1} parent=1 // pred_check_branch
      %117 = sbr.rel (0) target = $region29
    $region28: #{tpu_custom_call.1} parent=1 // pred_region
      %119 = dma.done [#allocation4], 16
    $region29: #{tpu_custom_call.1} parent=1 // pred_fallthru
      _
    %120 = sfence
    %121 = vsyncpa [#allocation4], 1

</llo_original>
